<compile_context>
chip_gen: v5e
topology: v5e:2x2
jax: 0.10.0
libtpu: 0.0.40
codegen_flags: <defaults>
</compile_context>

<pallas_src>
import jax
import jax.numpy as jnp
from jax import lax
from jax.experimental import pallas as pl
from jax.experimental.pallas import tpu as pltpu


_LANES = 1024                       # lane-dense last dim (multiple of 128)
_TARGET_TILE_BYTES = 2 * 1024 * 1024  # ~2 MiB per block: 4 live tiles ≈ 8 MiB
_MIN_KERNEL_BYTES = 256 * 1024      # below this, pallas_call overhead dominates


def _round_up(a: int, b: int) -> int:
    return ((a + b - 1) // b) * b


def _copy_kernel(x_ref, fmap_ref):
    # Single output: the captured feature-map copy.  No pass-through store.
    fmap_ref[...] = x_ref[...]


def _materialize_copy(x: jnp.ndarray) -> jnp.ndarray:
    """Lane-dense tiled identity copy of `x` via a Pallas kernel."""
    orig_shape = x.shape
    dtype = x.dtype
    itemsize = jnp.dtype(dtype).itemsize

    n = int(x.size)
    lanes = _LANES

    # Rows of 1024-wide lanes; sublane-align to 8.
    rows = _round_up(pl.cdiv(n, lanes), 8)

    # Tile rows sized by bytes (multiple of 8), capped at ~2 MiB per block.
    tile_rows_cap = max(8, (_TARGET_TILE_BYTES // (lanes * itemsize)) // 8 * 8)

    if rows >= 2 * tile_rows_cap:
        tile_rows = tile_rows_cap
    elif rows > 8:
        # Split roughly in half so the grid has >=2 steps (v7x: 2 TensorCores).
        tile_rows = min(tile_rows_cap, _round_up((rows + 1) // 2, 8))
    else:
        tile_rows = rows

    padded_rows = _round_up(rows, tile_rows)
    grid = (padded_rows // tile_rows,)

    padded_n = padded_rows * lanes
    flat = x.reshape(-1)
    if padded_n != n:
        flat = jnp.pad(flat, (0, padded_n - n))
    x2d = flat.reshape(padded_rows, lanes)

    fmap2d = pl.pallas_call(
        _copy_kernel,
        out_shape=jax.ShapeDtypeStruct((padded_rows, lanes), dtype),
        grid_spec=pltpu.PrefetchScalarGridSpec(
            num_scalar_prefetch=0,
            grid=grid,
            in_specs=[pl.BlockSpec((tile_rows, lanes), lambda i: (i, 0))],
            out_specs=pl.BlockSpec((tile_rows, lanes), lambda i: (i, 0)),
        ),
        compiler_params=pltpu.CompilerParams(
            dimension_semantics=("parallel",),
        ),
    )(x2d)

    return fmap2d.reshape(-1)[:n].reshape(orig_shape)


def catch_feature_map(x: jnp.ndarray, *, name: str = "",
                      force_kernel: bool = False):
    """Pallas/JAX equivalent of CatchFeatureMap.forward.

    Returns (y, feature_map):
      y           -- the unchanged input (pass-through, returned directly).
      feature_map -- the captured tensor; gradients are stopped (== .detach()).

    By default, small tensors (and any caller happy with a copy-free capture)
    skip the kernel entirely; set force_kernel=True to materialize a separate
    HBM buffer for the captured feature map via the Pallas copy kernel.
    """
    del name  # identifier only; no effect on computation
    y = x  # pass-through: JAX arrays are immutable, no copy needed.

    if x.size == 0:
        return y, lax.stop_gradient(x)

    nbytes = int(x.size) * jnp.dtype(x.dtype).itemsize
    if not force_kernel and nbytes < _MIN_KERNEL_BYTES:
        # Fast path: capture without any HBM traffic.
        return y, lax.stop_gradient(x)

    fmap = _materialize_copy(x)
    return y, lax.stop_gradient(fmap)


class CatchFeatureMapJax:
    """Thin stateful wrapper mirroring the PyTorch module's interface.

    Note: the side-effecting `self.feature_map = ...` assignment leaks tracers
    under jax.jit/scan — prefer the functional `catch_feature_map` there.
    """

    def __init__(self, name: str = ""):
        self.name = name
        self.feature_map = None

    def __call__(self, x: jnp.ndarray) -> jnp.ndarray:
        y, fmap = catch_feature_map(x, name=self.name)
        self.feature_map = fmap  # stop_gradient'ed capture (== .detach())
        return y


if __name__ == "__main__":
    key = jax.random.PRNGKey(0)
    # NCHW input, small shapes: batch=2, channels=4, spatial=16x16.
    x = jax.random.normal(key, (2, 4, 16, 16), dtype=jnp.float32)

    # 1) Default path (small tensor -> copy-free pass-through + capture).
    y_fast, fmap_fast = catch_feature_map(x)
    y_fast = jax.block_until_ready(y_fast)
    fmap_fast = jax.block_until_ready(fmap_fast)
    assert y_fast.shape == x.shape and y_fast.dtype == x.dtype
    assert jnp.array_equal(y_fast, x), "fast-path pass-through mismatch"
    assert jnp.array_equal(fmap_fast, x), "fast-path capture mismatch"

    # 2) Kernel path: force a materialized, lane-dense copy via pallas_call.
    y_k, fmap_k = catch_feature_map(x, force_kernel=True)
    y_k = jax.block_until_ready(y_k)
    fmap_k = jax.block_until_ready(fmap_k)
    assert y_k.shape == x.shape and y_k.dtype == x.dtype
    assert jnp.array_equal(y_k, x), "kernel-path pass-through mismatch"
    assert jnp.array_equal(fmap_k, x), "kernel-path captured feature map mismatch"

    # 3) Module-style wrapper (PyTorch-like interface).
    mod = CatchFeatureMapJax(name="demo")
    y = jax.block_until_ready(mod(x))
    fmap = jax.block_until_ready(mod.feature_map)
    assert jnp.array_equal(y, x) and jnp.array_equal(fmap, x)

    print("KERNEL_OK")
</pallas_src>

<mosaic_0001>
module attributes {stable_mosaic.version = 11 : i64} {
  func.func @_copy_kernel(%arg0: i32, %arg1: memref<8x1024xf32, #tpu.memory_space<vmem>>, %arg2: memref<8x1024xf32, #tpu.memory_space<vmem>>) attributes {dimension_semantics = [#tpu.dimension_semantics<parallel>], iteration_bounds = array<i64: 1>, scalar_prefetch = 0 : i64, scratch_operands = 0 : i64, tpu.core_type = #tpu.core_type<tc>, window_params = [{transform_indices = @transform_0, window_bounds = array<i64: 8, 1024>}, {transform_indices = @transform_1, window_bounds = array<i64: 8, 1024>}]} {
    %c0 = arith.constant 0 : index
    %c0_0 = arith.constant 0 : index
    %0 = vector.load %arg1[%c0, %c0_0] : memref<8x1024xf32, #tpu.memory_space<vmem>>, vector<8x1024xf32>
    %c0_1 = arith.constant 0 : index
    %c0_2 = arith.constant 0 : index
    %1 = vector.load %arg2[%c0_1, %c0_2] : memref<8x1024xf32, #tpu.memory_space<vmem>>, vector<8x1024xf32>
    tpu.vector_store %arg2[%c0_1, %c0_2], %0 {strides = array<i32>} : memref<8x1024xf32, #tpu.memory_space<vmem>>, vector<8x1024xf32>,
    return
  }
  func.func @transform_0(%arg0: i32) -> (i32, i32) {
    %c0_i32 = arith.constant 0 : i32
    %c0_i32_0 = arith.constant 0 : i32
    return %arg0, %c0_i32 : i32, i32
  }
  func.func @transform_1(%arg0: i32) -> (i32, i32) {
    %c0_i32 = arith.constant 0 : i32
    %c0_i32_0 = arith.constant 0 : i32
    return %arg0, %c0_i32 : i32, i32
  }
}

</mosaic_0001>

<llo_original>
// kernel: tpu_custom_call.1
$region0: #{tpu_custom_call.1}
  #allocation0 [shape = 'u32[]', space=smem, size = 0x4, offset = 0x4, fixed_abs, tag = 'smem constant byte address 0x4 - core index']
  #allocation1 [shape = 'u32[72,128]{1,0:T(1,128)}', space=vmem, size = 0x9000, scoped, tag = 'internal scratch']
  %s0 = inlined_call_operand.hbm [shape: f32[8,1024], index: 0, kind: input, shape index: {}]
  %s1 = inlined_call_operand.hbm [shape: f32[8,1024], index: 1, kind: output, shape index: {}]
  %s2 = sld [smem:[#allocation0]]
  $region18: #{tpu_custom_call.1} parent=0
    _
  %s4 = ssub.s32 1, %s2
  %s5 = scalar_select 0, %s4, %s2
  $region1: #{tpu_custom_call.1} parent=0
    #allocation2 [shape = 'u8[32768]{0}', space=vmem, size = 0x8000, scoped, tag = 'input window, operand 0, single buffered']
    #allocation3 [shape = 's32[1]{0}', space=sflag, size = 0x4, scoped, tag = 'scoped memory for tpu_custom_call.1']
    #allocation4 [shape = 's32[1]{0}', space=sflag, size = 0x4, scoped, tag = 'scoped memory for tpu_custom_call.1']
    #allocation5 [shape = 'u8[32768]{0}', space=vmem, size = 0x8000, scoped, tag = 'output window, operand 0, single buffered']
    %6 = vsyncpa [#allocation3], 0
    %7 = vsyncpa [#allocation4], 0
    // Predicated region
    $region2: #{tpu_custom_call.1} parent=1 // pred_check
      _
    $region3: #{tpu_custom_call.1} parent=1 // pred_check_branch
      %9 = sbr.rel (0) target = $region5
    $region4: #{tpu_custom_call.1} parent=1 // pred_region
      %11 = vsyncadd [#allocation3], 0
      %s13 = sshll.u32 %s0, 4
      %s14 = int_to_ptr.hbm [resolvable:$true] %s13
      %s15 = sshll.u32 [#allocation2], 4
      %s16 = int_to_ptr.vmem [resolvable:$true] %s15
      %18 = dma.hbm_to_vmem [thread:$0]  %s14, 1024, %s16, [#allocation3]
    $region5: #{tpu_custom_call.1} parent=1 // pred_fallthru
      _
    // Predicated region
    $region6: #{tpu_custom_call.1} parent=1 // pred_check
      _
    $region7: #{tpu_custom_call.1} parent=1 // pred_check_branch
      %20 = sbr.rel (0) target = $region9
    $region8: #{tpu_custom_call.1} parent=1 // pred_region
      %22 = dma.done [#allocation3], 1024
    $region9: #{tpu_custom_call.1} parent=1 // pred_fallthru
      _
    %v23 = vld [vmem:[#allocation2] sm:$0xff]
    %v24 = vld [vmem:[#allocation2 + $0x8] sm:$0xff]
    %v25 = vld [vmem:[#allocation2 + $0x10] sm:$0xff]
    %v26 = vld [vmem:[#allocation2 + $0x18] sm:$0xff]
    %v27 = vld [vmem:[#allocation2 + $0x20] sm:$0xff]
    %v28 = vld [vmem:[#allocation2 + $0x28] sm:$0xff]
    %v29 = vld [vmem:[#allocation2 + $0x30] sm:$0xff]
    %v30 = vld [vmem:[#allocation2 + $0x38] sm:$0xff]
    %31 = vst [vmem:[#allocation5] sm:$0xff] %v23
    %32 = vst [vmem:[#allocation5 + $0x8] sm:$0xff] %v24
    %33 = vst [vmem:[#allocation5 + $0x10] sm:$0xff] %v25
    %34 = vst [vmem:[#allocation5 + $0x18] sm:$0xff] %v26
    %35 = vst [vmem:[#allocation5 + $0x20] sm:$0xff] %v27
    %36 = vst [vmem:[#allocation5 + $0x28] sm:$0xff] %v28
    %37 = vst [vmem:[#allocation5 + $0x30] sm:$0xff] %v29
    %38 = vst [vmem:[#allocation5 + $0x38] sm:$0xff] %v30
    // Predicated region
    $region10: #{tpu_custom_call.1} parent=1 // pred_check
      _
    $region11: #{tpu_custom_call.1} parent=1 // pred_check_branch
      %40 = sbr.rel (0) target = $region13
    $region12: #{tpu_custom_call.1} parent=1 // pred_region
      %42 = vsyncadd [#allocation4], 0
      %s44 = sshll.u32 [#allocation5], 4
      %s45 = int_to_ptr.vmem [resolvable:$true] %s44
      %s46 = sshll.u32 %s1, 4
      %s47 = int_to_ptr.hbm [resolvable:$true] %s46
      %49 = dma.vmem_to_hbm [thread:$0]  %s45, 1024, %s47, [#allocation4]
    $region13: #{tpu_custom_call.1} parent=1 // pred_fallthru
      _
    // Predicated region
    $region14: #{tpu_custom_call.1} parent=1 // pred_check
      _
    $region15: #{tpu_custom_call.1} parent=1 // pred_check_branch
      %51 = sbr.rel (0) target = $region17
    $region16: #{tpu_custom_call.1} parent=1 // pred_region
      %53 = dma.done [#allocation4], 1024
    $region17: #{tpu_custom_call.1} parent=1 // pred_fallthru
      _
    %54 = vsyncpa [#allocation3], 1
    %55 = vsyncpa [#allocation4], 1

</llo_original>
